<compile_context>
chip_gen: v7x
topology: tpu7x:2x2x1
jax: 0.10.0
libtpu: 0.0.40
codegen_flags: <defaults>
</compile_context>

<pallas_src>
import jax
import jax.numpy as jnp
from jax.experimental import pallas as pl
from jax.experimental.pallas import tpu as pltpu


def outlayer_kernel(x_ref, w1_ref, aff_ref, b2_ref, o_ref):
    # aff_ref rows: 0 = gamma, 1 = beta, 2 = W2^T   (each lane-dense (1, inter))

    # ---- Linear(in_num -> inter_num), bias dropped --------------------------
    # b1 is cancelled exactly by the BN mean subtraction below, so it is never
    # loaded or added (one fewer DMA, one fewer VPU broadcast-add).
    h = jnp.dot(x_ref[...], w1_ref[...],
                preferred_element_type=jnp.float32)                 # (M, inter)

    # ---- BatchNorm1d(inter_num), training-mode batch statistics -------------
    # PyTorch BatchNorm1d on (B, C, L) reduces over dims (0, 2); after the
    # (B, N, C) -> (M, C) flatten that is exactly a reduction over rows.
    mean = jnp.mean(h, axis=0, keepdims=True)                        # (1, inter)
    var = jnp.mean((h - mean) * (h - mean), axis=0, keepdims=True)   # biased var

    gamma = aff_ref[0:1, :]                                          # (1, inter)
    beta = aff_ref[1:2, :]                                           # (1, inter)
    w2t = aff_ref[2:3, :]                                            # (1, inter)

    # Fused affine: normalize + gamma/beta collapse to one scale and one shift.
    scale = gamma * jax.lax.rsqrt(var + 1e-5)                        # (1, inter)
    shift = beta - mean * scale                                      # (1, inter)

    # ---- normalize + affine + ReLU (2 broadcast VPU ops + max per element) --
    h = jnp.maximum(h * scale + shift, 0.0)                          # (M, inter)

    # ---- Linear(inter_num -> 1) as lane-dense mul + row reduction -----------
    # Reducing the lane axis on the XLU avoids a 1-of-256-columns MXU matmul
    # and its near-empty result drain.
    y = jnp.sum(h * w2t, axis=-1) + b2_ref[0, 0]                     # (M,)

    # Lane-dense output: store as a (1, M) row instead of an (M, 1) column.
    o_ref[...] = y[None, :].astype(o_ref.dtype)                      # (1, M)


def outlayer_forward(x, w1, b1, gamma, beta, w2, b2):
    """x: (B, N, in_num) float32  ->  (B, N, 1) float32.

    b1 is accepted for interface parity with the PyTorch module but is NOT
    passed to the kernel: under training-mode BatchNorm it cancels exactly.
    """
    del b1  # algebraically dead under training-mode BN
    B, N, Fin = x.shape
    M = B * N
    inter = w1.shape[1]

    xm = x.reshape(M, Fin)
    # Pack gamma / beta / W2^T into a single lane-dense (3, inter) slab -> 1 DMA.
    aff = jnp.concatenate(
        [gamma.reshape(1, inter), beta.reshape(1, inter), w2.reshape(1, inter)],
        axis=0)                                                      # (3, inter)
    b2s = b2.reshape(1, 1)                                           # SMEM scalar

    out = pl.pallas_call(
        outlayer_kernel,
        out_shape=jax.ShapeDtypeStruct((1, M), jnp.float32),
        grid=(1,),
        in_specs=[
            pl.BlockSpec((M, Fin),     lambda i: (0, 0)),            # x
            pl.BlockSpec((Fin, inter), lambda i: (0, 0)),            # W1
            pl.BlockSpec((3, inter),   lambda i: (0, 0)),            # gamma|beta|W2^T
            pl.BlockSpec(memory_space=pltpu.MemorySpace.SMEM),       # b2 scalar
        ],
        out_specs=pl.BlockSpec((1, M), lambda i: (0, 0)),
        compiler_params=pltpu.CompilerParams(
            dimension_semantics=("arbitrary",)),
    )(xm, w1, aff, b2s)

    # TODO(synk): for large M = B*N (notably on v7x's 64 MiB VMEM) tile the M
    # axis over a grid with a two-pass BN (per-tile sum / sum-of-squares
    # accumulation, then a normalize+reduce pass) and mark the M axis
    # "parallel" so both v7x TensorCores share the rows.  At the small shapes
    # exercised here a single resident block is launch-overhead bound anyway.
    return out.reshape(B, N, 1)


def reference_forward(x, w1, b1, gamma, beta, w2, b2):
    """Pure-JAX reference with the full PyTorch semantics (including b1)."""
    B, N, Fin = x.shape
    h = x.reshape(B * N, Fin) @ w1 + b1
    mean = jnp.mean(h, axis=0, keepdims=True)
    var = jnp.mean((h - mean) ** 2, axis=0, keepdims=True)
    h = (h - mean) / jnp.sqrt(var + 1e-5)
    h = h * gamma + beta
    h = jnp.maximum(h, 0.0)
    y = h @ w2 + b2
    return y.reshape(B, N, 1)


if __name__ == "__main__":
    # Small shapes implied by the module: OutLayer(in_num, node_num, layer_num=2,
    # inter_num) applied to x of shape (batch, node_num, in_num).
    # inter = 128 keeps the hidden activations exactly one vreg-lane wide.
    B, N, IN_NUM, INTER = 2, 8, 32, 128

    key = jax.random.PRNGKey(0)
    kx, kw1, kb1, kg, kbeta, kw2, kb2 = jax.random.split(key, 7)

    x = jax.random.normal(kx, (B, N, IN_NUM), dtype=jnp.float32)

    # Deterministic synthetic parameters (PyTorch-Linear-like scale).
    s1 = 1.0 / jnp.sqrt(IN_NUM)
    w1 = jax.random.uniform(kw1, (IN_NUM, INTER), jnp.float32, -s1, s1)
    b1 = jax.random.uniform(kb1, (1, INTER), jnp.float32, -s1, s1)
    gamma = 1.0 + 0.1 * jax.random.normal(kg, (1, INTER), jnp.float32)
    beta = 0.1 * jax.random.normal(kbeta, (1, INTER), jnp.float32)
    s2 = 1.0 / jnp.sqrt(INTER)
    w2 = jax.random.uniform(kw2, (INTER, 1), jnp.float32, -s2, s2)
    b2 = jax.random.uniform(kb2, (1, 1), jnp.float32, -s2, s2)

    y = outlayer_forward(x, w1, b1, gamma, beta, w2, b2)
    y = jax.block_until_ready(y)

    y_ref = reference_forward(x, w1, b1, gamma, beta, w2, b2)
    assert y.shape == (B, N, 1)
    assert jnp.allclose(y, y_ref, atol=1e-4, rtol=1e-4), "mismatch vs reference"

    print("KERNEL_OK")
</pallas_src>

<mosaic_0001>
module attributes {stable_mosaic.version = 11 : i64} {
  func.func @outlayer_kernel(%arg0: i32, %arg1: memref<16x32xf32, #tpu.memory_space<vmem>>, %arg2: memref<32x128xf32, #tpu.memory_space<vmem>>, %arg3: memref<3x128xf32, #tpu.memory_space<vmem>>, %arg4: memref<1x1xf32, #tpu.memory_space<smem>>, %arg5: memref<1x16xf32, #tpu.memory_space<vmem>>) attributes {dimension_semantics = [#tpu.dimension_semantics<arbitrary>], iteration_bounds = array<i64: 1>, scalar_prefetch = 0 : i64, scratch_operands = 0 : i64, tpu.core_type = #tpu.core_type<tc>, window_params = [{pipeline_mode = #tpu.pipeline_mode<synchronous>, transform_indices = @transform_0, window_bounds = array<i64: 16, 32>}, {pipeline_mode = #tpu.pipeline_mode<synchronous>, transform_indices = @transform_1, window_bounds = array<i64: 32, 128>}, {pipeline_mode = #tpu.pipeline_mode<synchronous>, transform_indices = @transform_2, window_bounds = array<i64: 3, 128>}, {transform_indices = @transform_3, window_bounds = array<i64: 1, 1>}, {pipeline_mode = #tpu.pipeline_mode<synchronous>, transform_indices = @transform_4, window_bounds = array<i64: 1, 16>}]} {
    %c0 = arith.constant 0 : index
    %c0_0 = arith.constant 0 : index
    %0 = vector.load %arg1[%c0, %c0_0] : memref<16x32xf32, #tpu.memory_space<vmem>>, vector<16x32xf32>
    %c0_1 = arith.constant 0 : index
    %c0_2 = arith.constant 0 : index
    %1 = vector.load %arg2[%c0_1, %c0_2] : memref<32x128xf32, #tpu.memory_space<vmem>>, vector<32x128xf32>
    %cst = arith.constant dense<0.000000e+00> : vector<16x128xf32>
    %2 = tpu.matmul %0, %1, %cst {dimension_numbers = #tpu.dot_dimension_numbers<[1], [0], [0], [1], [0, 0, 1, 1], [], []>} : vector<16x32xf32>, vector<32x128xf32>, vector<16x128xf32> -> vector<16x128xf32>
    %cst_3 = arith.constant dense<0.000000e+00> : vector<128xf32>
    %3 = vector.multi_reduction <add>, %2, %cst_3 [0] : vector<16x128xf32> to vector<128xf32>
    %4 = vector.shape_cast %3 : vector<128xf32> to vector<1x128xf32>
    %cst_4 = arith.constant 1.600000e+01 : f32
    %5 = vector.broadcast %cst_4 : f32 to vector<1x128xf32>
    %6 = arith.divf %4, %5 : vector<1x128xf32>
    %7 = vector.broadcast %6 : vector<1x128xf32> to vector<16x128xf32>
    %8 = arith.subf %2, %7 : vector<16x128xf32>
    %9 = vector.broadcast %6 : vector<1x128xf32> to vector<16x128xf32>
    %10 = arith.subf %2, %9 : vector<16x128xf32>
    %11 = arith.mulf %8, %10 : vector<16x128xf32>
    %cst_5 = arith.constant dense<0.000000e+00> : vector<128xf32>
    %12 = vector.multi_reduction <add>, %11, %cst_5 [0] : vector<16x128xf32> to vector<128xf32>
    %13 = vector.shape_cast %12 : vector<128xf32> to vector<1x128xf32>
    %cst_6 = arith.constant 1.600000e+01 : f32
    %14 = vector.broadcast %cst_6 : f32 to vector<1x128xf32>
    %15 = arith.divf %13, %14 : vector<1x128xf32>
    %c0_7 = arith.constant 0 : index
    %c0_8 = arith.constant 0 : index
    %16 = vector.load %arg3[%c0_7, %c0_8] : memref<3x128xf32, #tpu.memory_space<vmem>>, vector<1x128xf32>
    %c1 = arith.constant 1 : index
    %c0_9 = arith.constant 0 : index
    %17 = vector.load %arg3[%c1, %c0_9] : memref<3x128xf32, #tpu.memory_space<vmem>>, vector<1x128xf32>
    %c2 = arith.constant 2 : index
    %c0_10 = arith.constant 0 : index
    %18 = vector.load %arg3[%c2, %c0_10] : memref<3x128xf32, #tpu.memory_space<vmem>>, vector<1x128xf32>
    %cst_11 = arith.constant 9.99999974E-6 : f32
    %19 = vector.broadcast %cst_11 : f32 to vector<1x128xf32>
    %20 = arith.addf %15, %19 : vector<1x128xf32>
    %21 = math.rsqrt %20 : vector<1x128xf32>
    %22 = arith.mulf %16, %21 : vector<1x128xf32>
    %23 = arith.mulf %6, %22 : vector<1x128xf32>
    %24 = arith.subf %17, %23 : vector<1x128xf32>
    %25 = vector.broadcast %22 : vector<1x128xf32> to vector<16x128xf32>
    %26 = arith.mulf %2, %25 : vector<16x128xf32>
    %27 = vector.broadcast %24 : vector<1x128xf32> to vector<16x128xf32>
    %28 = arith.addf %26, %27 : vector<16x128xf32>
    %cst_12 = arith.constant 0.000000e+00 : f32
    %29 = vector.broadcast %cst_12 : f32 to vector<16x128xf32>
    %30 = arith.maximumf %28, %29 : vector<16x128xf32>
    %31 = vector.broadcast %18 : vector<1x128xf32> to vector<16x128xf32>
    %32 = arith.mulf %30, %31 : vector<16x128xf32>
    %cst_13 = arith.constant dense<0.000000e+00> : vector<16xf32>
    %33 = vector.multi_reduction <add>, %32, %cst_13 [1] : vector<16x128xf32> to vector<16xf32>
    %c0_14 = arith.constant 0 : index
    %c0_15 = arith.constant 0 : index
    %34 = memref.load %arg4[%c0_14, %c0_15] : memref<1x1xf32, #tpu.memory_space<smem>>
    %35 = vector.broadcast %34 : f32 to vector<16xf32>
    %36 = arith.addf %33, %35 : vector<16xf32>
    %37 = vector.shape_cast %36 : vector<16xf32> to vector<1x16xf32>
    %c0_16 = arith.constant 0 : index
    %c0_17 = arith.constant 0 : index
    %38 = vector.load %arg5[%c0_16, %c0_17] : memref<1x16xf32, #tpu.memory_space<vmem>>, vector<1x16xf32>
    tpu.vector_store %arg5[%c0_16, %c0_17], %37 {strides = array<i32>} : memref<1x16xf32, #tpu.memory_space<vmem>>, vector<1x16xf32>,
    return
  }
  func.func @transform_0(%arg0: i32) -> (i32, i32) {
    %c0_i32 = arith.constant 0 : i32
    %c0_i32_0 = arith.constant 0 : i32
    %c0_i32_1 = arith.constant 0 : i32
    return %c0_i32, %c0_i32_0 : i32, i32
  }
  func.func @transform_1(%arg0: i32) -> (i32, i32) {
    %c0_i32 = arith.constant 0 : i32
    %c0_i32_0 = arith.constant 0 : i32
    %c0_i32_1 = arith.constant 0 : i32
    return %c0_i32, %c0_i32_0 : i32, i32
  }
  func.func @transform_2(%arg0: i32) -> (i32, i32) {
    %c0_i32 = arith.constant 0 : i32
    %c0_i32_0 = arith.constant 0 : i32
    %c0_i32_1 = arith.constant 0 : i32
    return %c0_i32, %c0_i32_0 : i32, i32
  }
  func.func @transform_3(%arg0: i32) -> (i32, i32) {
    %c0_i32 = arith.constant 0 : i32
    %c0_i32_0 = arith.constant 0 : i32
    %c0_i32_1 = arith.constant 0 : i32
    return %c0_i32, %c0_i32_0 : i32, i32
  }
  func.func @transform_4(%arg0: i32) -> (i32, i32) {
    %c0_i32 = arith.constant 0 : i32
    %c0_i32_0 = arith.constant 0 : i32
    %c0_i32_1 = arith.constant 0 : i32
    return %c0_i32, %c0_i32_0 : i32, i32
  }
}

</mosaic_0001>

<llo_original>
// kernel: tpu_custom_call.1
$region0: #{tpu_custom_call.1}
  #allocation0 [shape = 'u32[]', space=smem, size = 0x4, offset = 0x4, fixed_abs, tag = 'smem constant byte address 0x4 - core index']
  #allocation1 [shape = 'u32[144,128]{1,0:T(1,128)}', space=vmem, size = 0x12000, scoped, tag = 'internal scratch']
  #allocation2 [shape = 'f32[1,1]{1,0:T(1,128)S(6)}', space=smem, size = 0x200, scoped, tag = 'scoped memory for tpu_custom_call.1']
  %s0 = inlined_call_operand.hbm [shape: f32[16,32], index: 0, kind: input, shape index: {}]
  %s1 = inlined_call_operand.hbm [shape: f32[32,128], index: 1, kind: input, shape index: {}]
  %s2 = inlined_call_operand.vmem [shape: f32[3,128], index: 2, kind: input, shape index: {}]
  %s3 = inlined_call_operand.<no memory space> [shape: f32[1,1], index: 3, kind: input, shape index: {}]
  %s4 = inlined_call_operand.hbm [shape: f32[1,16], index: 4, kind: output, shape index: {}]
  %s5 = sld [smem:[#allocation0]]
  $region34: #{tpu_custom_call.1} parent=0
    _
  %s7 = ssub.s32 1, %s5
  %s8 = scalar_select 0, %s7, %s5
  %9 = sst [smem:[#allocation2]] %s3
  $region1: #{tpu_custom_call.1} parent=0
    #allocation3 [shape = 'u8[8192]{0}', space=vmem, size = 0x2000, scoped, tag = 'input window, operand 0, single buffered']
    #allocation4 [shape = 's32[1]{0}', space=sflag, size = 0x4, scoped, tag = 'scoped memory for tpu_custom_call.1']
    #allocation5 [shape = 's32[1]{0}', space=sflag, size = 0x4, scoped, tag = 'scoped memory for tpu_custom_call.1']
    #allocation6 [shape = 'u8[16384]{0}', space=vmem, size = 0x4000, scoped, tag = 'input window, operand 1, single buffered']
    #allocation7 [shape = 's32[1]{0}', space=sflag, size = 0x4, scoped, tag = 'scoped memory for tpu_custom_call.1']
    #allocation8 [shape = 'u8[512]{0}', space=vmem, size = 0x400, scoped, tag = 'output window, operand 0, single buffered']
    %10 = vsyncpa [#allocation4], 0
    %11 = vsyncpa [#allocation7], 0
    %12 = vsyncpa [#allocation5], 0
    // Predicated region
    $region2: #{tpu_custom_call.1} parent=1 // pred_check
      _
    $region3: #{tpu_custom_call.1} parent=1 // pred_check_branch
      %14 = sbr.rel (0) target = $region5
    $region4: #{tpu_custom_call.1} parent=1 // pred_region
      %s16 = ssub.s32 256, 256
      %17 = vsyncadd [#allocation4], %s16
      %s18 = sshll.u32 [#allocation3], 4
      %s19 = int_to_ptr.vmem [resolvable:$true] %s18
      %24 = dma.hbm_to_vmem [thread:$0]  %s0, 256, %s19, [#allocation4], 128, 128, 8
    $region5: #{tpu_custom_call.1} parent=1 // pred_fallthru
      _
    // Predicated region
    $region6: #{tpu_custom_call.1} parent=1 // pred_check
      _
    $region7: #{tpu_custom_call.1} parent=1 // pred_check_branch
      %26 = sbr.rel (0) target = $region9
    $region8: #{tpu_custom_call.1} parent=1 // pred_region
      %s28 = ssub.s32 512, 512
      %29 = vsyncadd [#allocation7], %s28
      %s30 = sshll.u32 [#allocation6], 4
      %s31 = int_to_ptr.vmem [resolvable:$true] %s30
      %36 = dma.hbm_to_vmem [thread:$0]  %s1, 512, %s31, [#allocation7], 128, 128, 8
    $region9: #{tpu_custom_call.1} parent=1 // pred_fallthru
      _
    // Predicated region
    $region10: #{tpu_custom_call.1} parent=1 // pred_check
      _
    $region11: #{tpu_custom_call.1} parent=1 // pred_check_branch
      %38 = sbr.rel (0) target = $region13
    $region12: #{tpu_custom_call.1} parent=1 // pred_region
      _
    $region13: #{tpu_custom_call.1} parent=1 // pred_fallthru
      _
    // Predicated region
    $region14: #{tpu_custom_call.1} parent=1 // pred_check
      _
    $region15: #{tpu_custom_call.1} parent=1 // pred_check_branch
      %40 = sbr.rel (0) target = $region17
    $region16: #{tpu_custom_call.1} parent=1 // pred_region
      _
    $region17: #{tpu_custom_call.1} parent=1 // pred_fallthru
      _
    // Predicated region
    $region18: #{tpu_custom_call.1} parent=1 // pred_check
      _
    $region19: #{tpu_custom_call.1} parent=1 // pred_check_branch
      %42 = sbr.rel (0) target = $region21
    $region20: #{tpu_custom_call.1} parent=1 // pred_region
      %43 = dma.done [#allocation4], 256
    $region21: #{tpu_custom_call.1} parent=1 // pred_fallthru
      _
    // Predicated region
    $region22: #{tpu_custom_call.1} parent=1 // pred_check
      _
    $region23: #{tpu_custom_call.1} parent=1 // pred_check_branch
      %45 = sbr.rel (0) target = $region25
    $region24: #{tpu_custom_call.1} parent=1 // pred_region
      %46 = dma.done [#allocation7], 512
    $region25: #{tpu_custom_call.1} parent=1 // pred_fallthru
      _
    %v47 = vld [vmem:[#allocation3] sm:$0xff]
    %v48 = vld [vmem:[#allocation3 + $0x8] sm:$0xff]
    %v49 = vld [vmem:[#allocation6] sm:$0xff]
    %v50 = vld [vmem:[#allocation6 + $0x8] sm:$0xff]
    %v51 = vld [vmem:[#allocation6 + $0x10] sm:$0xff]
    %v52 = vld [vmem:[#allocation6 + $0x18] sm:$0xff]
    %vm53 = vcmask 261120
    %v55 = vsel %vm53, %v47, 0
    %v58 = vsel %vm53, %v48, 0
    %60 = vmatprep.subr.mxu0 0.0
    %61 = vmatpush1.msra.mxu0 %v49
    %62 = vmatprep.subr.mxu0 0.0
    %63 = vmatpush1.msra.mxu0 %v50
    %64 = vmatprep.subr.mxu0 0.0
    %65 = vmatpush1.msra.mxu0 %v51
    %66 = vmatprep.subr.mxu0 0.0
    %67 = vmatpush1.msra.mxu0 %v52
    %68 = vmatprep.subr.mxu0 0.0
    %69 = vmatpush1.msra.mxu0 0.0
    %70 = vmatprep.subr.mxu0 0.0
    %71 = vmatpush1.msra.mxu0 0.0
    %72 = vmatprep.subr.mxu0 0.0
    %73 = vmatpush1.msra.mxu0 0.0
    %74 = vmatprep.subr.mxu0 0.0
    %75 = vmatpush1.msra.mxu0 0.0
    %76 = vmatprep.subr.mxu0 0.0
    %77 = vmatpush1.msra.mxu0 0.0
    %78 = vmatprep.subr.mxu0 0.0
    %79 = vmatpush1.msra.mxu0 0.0
    %80 = vmatprep.subr.mxu0 0.0
    %81 = vmatpush1.msra.mxu0 0.0
    %82 = vmatprep.subr.mxu0 0.0
    %83 = vmatpush1.msra.mxu0 0.0
    %84 = vmatprep.subr.mxu0 0.0
    %85 = vmatpush1.msra.mxu0 0.0
    %86 = vmatprep.subr.mxu0 0.0
    %87 = vmatpush1.msra.mxu0 0.0
    %88 = vmatprep.subr.mxu0 0.0
    %89 = vmatpush1.msra.mxu0 0.0
    %90 = vmatprep.subr.mxu0 0.0
    %91 = vmatpush1.msra.mxu0 0.0
    %92 = vmatprep.subr.mxu0 0.0
    %93 = vmatpush1.msra.mxu0 0.0
    %94 = vmatprep.subr.mxu0 0.0
    %95 = vmatpush1.msra.mxu0 0.0
    %96 = vmatprep.subr.mxu0 0.0
    %97 = vmatpush1.msra.mxu0 0.0
    %98 = vmatprep.subr.mxu0 0.0
    %99 = vmatpush1.msra.mxu0 0.0
    %100 = vmatprep.subr.mxu0 0.0
    %101 = vmatpush1.msra.mxu0 0.0
    %102 = vmatprep.subr.mxu0 0.0
    %103 = vmatpush1.msra.mxu0 0.0
    %104 = vmatprep.subr.mxu0 0.0
    %105 = vmatpush1.msra.mxu0 0.0
    %106 = vmatprep.subr.mxu0 0.0
    %107 = vmatpush1.msra.mxu0 0.0
    %108 = vmatprep.subr.mxu0 0.0
    %109 = vmatpush1.msra.mxu0 0.0
    %110 = vmatprep.subr.mxu0 0.0
    %111 = vmatpush1.msra.mxu0 0.0
    %112 = vmatprep.subr.mxu0 0.0
    %113 = vmatpush1.msra.mxu0 0.0
    %114 = vmatprep.subr.mxu0 0.0
    %115 = vmatpush1.msra.mxu0 0.0
    %116 = vmatprep.subr.mxu0 0.0
    %117 = vmatpush1.msra.mxu0 0.0
    %118 = vmatprep.subr.mxu0 0.0
    %119 = vmatpush1.msra.mxu0 0.0
    %120 = vmatprep.subr.mxu0 0.0
    %121 = vmatpush1.msra.mxu0 0.0
    %122 = vmatprep.subr.mxu0 0.0
    %123 = vmatpush1.msra.mxu0 0.0
    %124 = vmatprep.mubr.f32.mxu0 0.0
    %125 = vmatmul.mubr.f32.gmra.mrb[0].mxu0 %v55
    %v126 = vpop.f32.mrb[0].mxu0
    %v127 = vadd.f32 0.0, %v126
    %v128 = vpop.f32.mrb[0].mxu0
    %129 = vmatprep.mubr.f32.mxu0 0.0
    %130 = vmatmul.mubr.f32.gmra.mrb[0].mxu0 %v58
    %v131 = vpop.f32.mrb[0].mxu0
    %v132 = vadd.f32 0.0, %v131
    %v133 = vpop.f32.mrb[0].mxu0
    %134 = vdwg.mxu0
    %v135 = vadd.f32 %v127, %v132
    %v136 = vrot.slane %v135, 4
    %v137 = vadd.f32 %v135, %v136
    %v138 = vrot.slane %v137, 2
    %v139 = vadd.f32 %v137, %v138
    %v140 = vrot.slane %v139, 1
    %v141 = vadd.f32 %v139, %v140
    %v142 = vrcp.pop 16.0
    %v143 = vmul.f32 %v141, %v142
    %v144 = vsub.f32 %v127, %v143
    %v145 = vsub.f32 %v132, %v143
    %v146 = vmul.f32 %v144, %v144
    %v147 = vmul.f32 %v145, %v145
    %v148 = vadd.f32 %v146, %v147
    %v149 = vrot.slane %v148, 4
    %v150 = vadd.f32 %v148, %v149
    %v151 = vrot.slane %v150, 2
    %v152 = vadd.f32 %v150, %v151
    %v153 = vrot.slane %v152, 1
    %v154 = vadd.f32 %v152, %v153
    %v155 = vmul.f32 %v154, %v142
    %v156 = vld [vmem:[%s2] sm:$0x1]
    %v157 = vld [vmem:[%s2 + $0x1] sm:$0x1]
    %v158 = vld [vmem:[%s2 + $0x2] sm:$0x1]
    %v159 = vadd.f32 %v155, 1e-05
    %v160 = vrsqrt.pop %v159
    %v161 = vmul.f32 %v156, %v160
    %v162 = vmul.f32 %v143, %v161
    %v163 = vsub.f32 %v157, %v162
    %v164 = vlaneseq
    %v165 = vshrl.u32 %v164, 7
    %v166 = vsub.s32 0, %v165
    %v167 = vrot.slane %v161, %v166
    %v168 = vmul.f32 %v127, %v167
    %v169 = vmul.f32 %v132, %v167
    %v170 = vlaneseq
    %v171 = vshrl.u32 %v170, 7
    %v172 = vsub.s32 0, %v171
    %v173 = vrot.slane %v163, %v172
    %v174 = vadd.f32 %v168, %v173
    %v175 = vadd.f32 %v169, %v173
    %v176 = vmax.f32 %v174, 0.0
    %v177 = vmax.f32 %v175, 0.0
    %v178 = vlaneseq
    %v179 = vshrl.u32 %v178, 7
    %v180 = vsub.s32 0, %v179
    %v181 = vrot.slane %v158, %v180
    %v182 = vmul.f32 %v176, %v181
    %v183 = vmul.f32 %v177, %v181
    %184 = vadd.xlane.f32.xlu0 %v182
    %v185 = vpop.xlane.xlu0 %184
    %186 = vadd.xlane.f32.xlu0 %v183
    %v187 = vpop.xlane.xlu0 %186
    %s188 = sld [smem:[#allocation2]]
    %v189 = vstv %s188
    %v190 = vadd.f32 %v185, %v189
    %v191 = vadd.f32 %v187, %v189
    %v194 = vlaneseq
    %v195 = vand.u32 %v194, 127
    %v196 = vlaneseq
    %v197 = vshrl.u32 %v196, 7
    %v198 = vsub.s32 %v195, %v197
    %v199 = vrot.slane %v190, %v198
    %v200 = vadd.s32 %v195, 4294967288
    %v201 = vlaneseq
    %v202 = vshrl.u32 %v201, 7
    %v203 = vsub.s32 %v200, %v202
    %v204 = vrot.slane %v191, %v203
    %vm205 = vcmask 130112
    %v206 = vsel %vm205, %v204, %v199
    %vm208 = vcmask 122880
    %209 = vst.msk [vmem:[#allocation8] sm:$0x1] %vm208, %v206
    // Predicated region
    $region26: #{tpu_custom_call.1} parent=1 // pred_check
      _
    $region27: #{tpu_custom_call.1} parent=1 // pred_check_branch
      %211 = sbr.rel (0) target = $region29
    $region28: #{tpu_custom_call.1} parent=1 // pred_region
      %s213 = ssub.s32 16, 16
      %214 = vsyncadd [#allocation5], %s213
      %s216 = sshll.u32 [#allocation8], 4
      %s217 = int_to_ptr.vmem [resolvable:$true] %s216
      %219 = dma.vmem_to_hbm [thread:$0]  %s217, 16, %s4, [#allocation5]
    $region29: #{tpu_custom_call.1} parent=1 // pred_fallthru
      _
    // Predicated region
    $region30: #{tpu_custom_call.1} parent=1 // pred_check
      _
    $region31: #{tpu_custom_call.1} parent=1 // pred_check_branch
      %221 = sbr.rel (0) target = $region33
    $region32: #{tpu_custom_call.1} parent=1 // pred_region
      %222 = dma.done [#allocation5], 16
    $region33: #{tpu_custom_call.1} parent=1 // pred_fallthru
      _
    %223 = vsyncpa [#allocation4], 1
    %224 = vsyncpa [#allocation7], 1
    %225 = vsyncpa [#allocation5], 1

</llo_original>
